<compile_context>
chip_gen: v5e
topology: v5e:2x2
jax: 0.10.0
libtpu: 0.0.40
codegen_flags: <defaults>
</compile_context>

<pallas_src>
import math
from functools import partial

import jax
import jax.numpy as jnp
from jax.experimental import pallas as pl
from jax.experimental.pallas import tpu as pltpu

EXPANSION = 4


def _round_up(x, m):
    return ((x + m - 1) // m) * m


# ----------------------------------------------------------------------------
# 1x1x1 conv == tiled bf16 matmul with fused BN-statistics epilogue
# ----------------------------------------------------------------------------
def _mm_stats_kernel(a_ref, b_ref, o_ref, st_ref, acc_ref):
    @pl.when(pl.program_id(2) == 0)
    def _():
        acc_ref[...] = jnp.zeros_like(acc_ref)

    acc_ref[...] += jnp.dot(a_ref[...], b_ref[...],
                            preferred_element_type=jnp.float32)

    @pl.when(pl.program_id(2) == pl.num_programs(2) - 1)
    def _():
        acc = acc_ref[...]
        o_ref[...] = acc.astype(o_ref.dtype)
        # BN statistics ride for free under the MXU-bound matmul.
        cs = jnp.sum(acc, axis=0, keepdims=True)
        cq = jnp.sum(acc * acc, axis=0, keepdims=True)
        st_ref[...] = jnp.concatenate([cs, cq], axis=0)[None]


def matmul_with_stats(a, b):
    """bf16 (M,K) @ (K,N) -> f32 (M,N) plus per-column sum and sum-of-squares."""
    M, K = a.shape
    K2, N = b.shape
    assert K == K2

    # 256-wide tiles fill v6e/v7x's 256x256 MXU and decompose into 128x128
    # passes on v5e; tk up to 512 keeps the reduction grid short.
    if M >= 512:
        tm = 256
    elif M >= 128:
        tm = 128
    else:
        tm = _round_up(M, 16)
    Mp = _round_up(M, tm)

    Np = _round_up(N, 128)
    tn = 256 if (N >= 256 and Np % 256 == 0) else 128

    Kp = _round_up(K, 128)
    tk = 128
    for cand in (512, 256, 128):
        if Kp % cand == 0:
            tk = cand
            break

    a_p = jnp.pad(a, ((0, Mp - M), (0, Kp - K)))
    b_p = jnp.pad(b, ((0, Kp - K), (0, Np - N)))

    gm, gn, gk = Mp // tm, Np // tn, Kp // tk
    out, st = pl.pallas_call(
        _mm_stats_kernel,
        out_shape=(jax.ShapeDtypeStruct((Mp, Np), jnp.float32),
                   jax.ShapeDtypeStruct((gm, 2, Np), jnp.float32)),
        grid=(gm, gn, gk),
        in_specs=[
            pl.BlockSpec((tm, tk), lambda i, j, k: (i, k)),
            pl.BlockSpec((tk, tn), lambda i, j, k: (k, j)),
        ],
        out_specs=[
            pl.BlockSpec((tm, tn), lambda i, j, k: (i, j)),
            pl.BlockSpec((1, 2, tn), lambda i, j, k: (i, 0, j)),
        ],
        scratch_shapes=[pltpu.VMEM((tm, tn), jnp.float32)],
        compiler_params=pltpu.CompilerParams(
            dimension_semantics=("parallel", "parallel", "arbitrary")),
    )(a_p, b_p)

    if Mp != M or Np != N:
        out = out[:M, :N]
    colsum = jnp.sum(st[:, 0, :N], axis=0)
    colsq = jnp.sum(st[:, 1, :N], axis=0)
    return out, colsum, colsq


# ----------------------------------------------------------------------------
# 3x3x3 conv (stride 1, pad 1) with im2col fused inside the kernel + BN stats
# ----------------------------------------------------------------------------
def _conv3x3x3_kernel(x0_ref, x1_ref, x2_ref, w_ref, m_ref, y_ref, st_ref,
                      *, Wp, Lout):
    cout = w_ref.shape[-1]
    acc = jnp.zeros((Lout, cout), jnp.float32)
    # 27 taps = 27 row-offset matmuls on the flattened (row = h*Wp + w) grid.
    for dz, xr in enumerate((x0_ref, x1_ref, x2_ref)):
        for dy in range(3):
            for dx in range(3):
                off = dy * Wp + dx
                a = xr[0, 0, off:off + Lout, :]            # (Lout, Cin) bf16
                acc += jnp.dot(a, w_ref[dz, dy, dx],
                               preferred_element_type=jnp.float32)
    y_ref[...] = acc.reshape(1, 1, Lout, cout).astype(y_ref.dtype)
    valid = acc * m_ref[...]                               # mask halo rows
    cs = jnp.sum(valid, axis=0, keepdims=True)
    cq = jnp.sum(valid * valid, axis=0, keepdims=True)
    st_ref[...] = jnp.concatenate([cs, cq], axis=0).reshape(1, 1, 2, cout)


def conv3x3x3_bn_stats(x, w_packed):
    """3x3x3 conv, stride 1, padding 1, channels-last, with fused BN stats.

    x: (N, D, H, W, Cin) (any float dtype, used as bf16 on the MXU)
    w_packed: (3, 3, 3, Cin, Cout) bf16
    Returns y (N, D, H, W, Cout) f32, column sum (Cout,), column sumsq (Cout,).
    """
    N, D, H, W, Cin = x.shape
    Cout = w_packed.shape[-1]
    Hp, Wp = H + 2, W + 2
    Lout = H * Wp                        # output rows per (n, d) tile (padded W grid)
    Rp = _round_up(Hp * Wp + 2, 8)       # flattened input rows (+ halo for dx taps)

    xp = jnp.pad(x, ((0, 0), (1, 1), (1, 1), (1, 1), (0, 0))).astype(jnp.bfloat16)
    xf = xp.reshape(N, D + 2, Hp * Wp, Cin)
    xf = jnp.pad(xf, ((0, 0), (0, 0), (0, Rp - Hp * Wp), (0, 0)))

    # Static validity mask (selects the real H x W window out of the H x Wp grid).
    hh = jnp.arange(Lout) // Wp
    ww = jnp.arange(Lout) % Wp
    mask = ((hh < H) & (ww < W)).astype(jnp.float32).reshape(Lout, 1)

    kern = partial(_conv3x3x3_kernel, Wp=Wp, Lout=Lout)
    y, st = pl.pallas_call(
        kern,
        out_shape=(jax.ShapeDtypeStruct((N, D, Lout, Cout), jnp.float32),
                   jax.ShapeDtypeStruct((N, D, 2, Cout), jnp.float32)),
        grid=(N, D),
        in_specs=[
            # three depth taps of the same padded activation (3 reads, not 27)
            pl.BlockSpec((1, 1, Rp, Cin), lambda n, d: (n, d, 0, 0)),
            pl.BlockSpec((1, 1, Rp, Cin), lambda n, d: (n, d + 1, 0, 0)),
            pl.BlockSpec((1, 1, Rp, Cin), lambda n, d: (n, d + 2, 0, 0)),
            pl.BlockSpec((3, 3, 3, Cin, Cout), lambda n, d: (0, 0, 0, 0, 0)),
            pl.BlockSpec((Lout, 1), lambda n, d: (0, 0)),
        ],
        out_specs=[
            pl.BlockSpec((1, 1, Lout, Cout), lambda n, d: (n, d, 0, 0)),
            pl.BlockSpec((1, 1, 2, Cout), lambda n, d: (n, d, 0, 0)),
        ],
        compiler_params=pltpu.CompilerParams(
            dimension_semantics=("parallel", "parallel")),
    )(xf, xf, xf, w_packed, mask)

    y = y.reshape(N, D, H, Wp, Cout)[:, :, :, :W, :]
    colsum = jnp.sum(st[:, :, 0, :], axis=(0, 1))
    colsq = jnp.sum(st[:, :, 1, :], axis=(0, 1))
    return y, colsum, colsq


# ----------------------------------------------------------------------------
# BatchNorm (training-mode batch statistics) + ReLU / residual, tiled kernels
# ----------------------------------------------------------------------------
def bn_scale_shift(colsum, colsq, m_rows, gamma, beta, eps=1e-5):
    # Note: single-pass E[x^2]-E[x]^2 in f32; for very large M a two-pass /
    # Welford reduction would track PyTorch more tightly.
    mean = colsum / m_rows
    var = jnp.maximum(colsq / m_rows - mean * mean, 0.0)   # biased, like PyTorch
    scale = gamma * jax.lax.rsqrt(var + eps)
    shift = beta - mean * scale
    return scale, shift


def _scale_shift_kernel(x_ref, s_ref, b_ref, o_ref, *, relu):
    y = x_ref[...] * s_ref[...] + b_ref[...]
    if relu:
        y = jnp.maximum(y, 0.0)
    o_ref[...] = y.astype(o_ref.dtype)


def _bn_add_relu_kernel(a_ref, sa_ref, ba_ref, b_ref, sb_ref, bb_ref, o_ref):
    y = (a_ref[...] * sa_ref[...] + ba_ref[...]
         + b_ref[...] * sb_ref[...] + bb_ref[...])
    o_ref[...] = jnp.maximum(y, 0.0).astype(o_ref.dtype)


def _rows_block(m_rows, n_cols):
    """Row-block size: ~<=2 MiB of f32 per input block, multiple of 16."""
    target = max(16, ((1 << 21) // (4 * n_cols)) // 16 * 16)
    blk = min(1024, target)
    if m_rows <= blk:
        blk = _round_up(m_rows, 16)
    return blk, _round_up(m_rows, blk)


def _fold_lanes(m_rows, n_cols):
    """Fold rows into lanes so the stored last dim is >= 128 (lane-dense)."""
    f = max(1, 128 // n_cols)
    return f if (f > 1 and m_rows % f == 0) else 1


def bn_apply(x2, scale, shift, *, relu, out_dtype=jnp.float32):
    """y = x * scale + shift (optionally ReLU), tiled over rows."""
    M, C = x2.shape
    f = _fold_lanes(M, C)
    Mf, Cf = M // f, C * f
    xf = x2.reshape(Mf, Cf)
    s = jnp.tile(scale, f).reshape(1, Cf)
    b = jnp.tile(shift, f).reshape(1, Cf)

    blk, Mp = _rows_block(Mf, Cf)
    if Mp != Mf:
        xf = jnp.pad(xf, ((0, Mp - Mf), (0, 0)))
    y = pl.pallas_call(
        partial(_scale_shift_kernel, relu=relu),
        out_shape=jax.ShapeDtypeStruct((Mp, Cf), out_dtype),
        grid=(Mp // blk,),
        in_specs=[pl.BlockSpec((blk, Cf), lambda i: (i, 0)),
                  pl.BlockSpec((1, Cf), lambda i: (0, 0)),
                  pl.BlockSpec((1, Cf), lambda i: (0, 0))],
        out_specs=pl.BlockSpec((blk, Cf), lambda i: (i, 0)),
        compiler_params=pltpu.CompilerParams(
            dimension_semantics=("parallel",)),
    )(xf, s, b)
    if Mp != Mf:
        y = y[:Mf]
    return y.reshape(M, C)


def bn_add_relu(a2, sa, ba, b2, sb, bb):
    """y = relu(a*sa + ba + b*sb + bb): bn3 + shortcut-bn + residual + ReLU."""
    M, C = a2.shape
    f = _fold_lanes(M, C)
    Mf, Cf = M // f, C * f
    af = a2.reshape(Mf, Cf)
    bf = b2.reshape(Mf, Cf)
    sa_f = jnp.tile(sa, f).reshape(1, Cf)
    ba_f = jnp.tile(ba, f).reshape(1, Cf)
    sb_f = jnp.tile(sb, f).reshape(1, Cf)
    bb_f = jnp.tile(bb, f).reshape(1, Cf)

    blk, Mp = _rows_block(Mf, Cf)
    if Mp != Mf:
        af = jnp.pad(af, ((0, Mp - Mf), (0, 0)))
        bf = jnp.pad(bf, ((0, Mp - Mf), (0, 0)))
    y = pl.pallas_call(
        _bn_add_relu_kernel,
        out_shape=jax.ShapeDtypeStruct((Mp, Cf), jnp.float32),
        grid=(Mp // blk,),
        in_specs=[pl.BlockSpec((blk, Cf), lambda i: (i, 0)),
                  pl.BlockSpec((1, Cf), lambda i: (0, 0)),
                  pl.BlockSpec((1, Cf), lambda i: (0, 0)),
                  pl.BlockSpec((blk, Cf), lambda i: (i, 0)),
                  pl.BlockSpec((1, Cf), lambda i: (0, 0)),
                  pl.BlockSpec((1, Cf), lambda i: (0, 0))],
        out_specs=pl.BlockSpec((blk, Cf), lambda i: (i, 0)),
        compiler_params=pltpu.CompilerParams(
            dimension_semantics=("parallel",)),
    )(af, sa_f, ba_f, bf, sb_f, bb_f)
    if Mp != Mf:
        y = y[:Mf]
    return y.reshape(M, C)


# ----------------------------------------------------------------------------
# Bottleneck forward (matches the PyTorch module, BN in training mode)
# ----------------------------------------------------------------------------
def bottleneck_forward(x_ncdhw, params):
    stride = params['stride']
    x = jnp.transpose(x_ncdhw, (0, 2, 3, 4, 1)).astype(jnp.float32)   # NDHWC
    N, D, H, W, Cin = x.shape

    planes = params['w1'].shape[1]
    cexp = params['w3'].shape[1]

    # conv1: 1x1x1, stride=s (stride lives on conv1 in this Bottleneck).
    xs = x[:, ::stride, ::stride, ::stride, :]
    N1, D1, H1, W1, _ = xs.shape
    M1 = N1 * D1 * H1 * W1
    a1 = xs.reshape(M1, Cin).astype(jnp.bfloat16)

    out1, cs1, cq1 = matmul_with_stats(a1, params['w1'])
    s1, b1 = bn_scale_shift(cs1, cq1, M1, params['bn1_g'], params['bn1_b'])
    h1 = bn_apply(out1, s1, b1, relu=True, out_dtype=jnp.bfloat16)
    h1 = h1.reshape(N1, D1, H1, W1, planes)

    # conv2: 3x3x3, stride 1, pad 1 (im2col fused in-kernel + BN stats).
    out2, cs2, cq2 = conv3x3x3_bn_stats(h1, params['w2'])
    s2, b2 = bn_scale_shift(cs2, cq2, M1, params['bn2_g'], params['bn2_b'])
    h2 = bn_apply(out2.reshape(M1, planes), s2, b2, relu=True,
                  out_dtype=jnp.bfloat16)

    # conv3: 1x1x1.
    out3, cs3, cq3 = matmul_with_stats(h2, params['w3'])
    s3, b3 = bn_scale_shift(cs3, cq3, M1, params['bn3_g'], params['bn3_b'])

    # Shortcut: identity or 1x1x1 downsample conv + BN.
    if 'wd' in params:
        outd, csd, cqd = matmul_with_stats(a1, params['wd'])
        sd, bd = bn_scale_shift(csd, cqd, M1, params['bnd_g'], params['bnd_b'])
        ident = outd
    else:
        ident = x.reshape(M1, cexp)       # stride == 1 and Cin == planes * 4
        sd = jnp.ones((cexp,), jnp.float32)
        bd = jnp.zeros((cexp,), jnp.float32)

    # bn3 + shortcut-bn + residual add + ReLU fused into one tiled pass.
    y = bn_add_relu(out3, s3, b3, ident, sd, bd)
    y = y.reshape(N1, D1, H1, W1, cexp)
    return jnp.transpose(y, (0, 4, 1, 2, 3))                 # back to NCDHW


# ----------------------------------------------------------------------------
# Deterministic parameter construction with pre-packed (lane-dense) weights
# ----------------------------------------------------------------------------
def init_bottleneck_params(key, inplanes, planes, stride=1, with_downsample=None):
    if with_downsample is None:
        with_downsample = (stride != 1) or (inplanes != planes * EXPANSION)
    ks = iter(jax.random.split(key, 8))

    def conv_w(k, cout, cin, ksz):
        n = ksz * ksz * cout
        std = math.sqrt(2.0 / n)
        return std * jax.random.normal(k, (cout, cin, ksz, ksz, ksz), jnp.float32)

    w1 = conv_w(next(ks), planes, inplanes, 1)
    w2 = conv_w(next(ks), planes, planes, 3)
    w3 = conv_w(next(ks), planes * EXPANSION, planes, 1)

    p = {
        'stride': stride,
        # pre-packed once: (K, Cout) / (kd, kh, kw, Cin, Cout), bf16
        'w1': w1.reshape(planes, inplanes).T.astype(jnp.bfloat16),
        'w2': jnp.transpose(w2, (2, 3, 4, 1, 0)).astype(jnp.bfloat16),
        'w3': w3.reshape(planes * EXPANSION, planes).T.astype(jnp.bfloat16),
        'bn1_g': jnp.ones((planes,), jnp.float32),
        'bn1_b': jnp.zeros((planes,), jnp.float32),
        'bn2_g': jnp.ones((planes,), jnp.float32),
        'bn2_b': jnp.zeros((planes,), jnp.float32),
        'bn3_g': jnp.ones((planes * EXPANSION,), jnp.float32),
        'bn3_b': jnp.zeros((planes * EXPANSION,), jnp.float32),
    }
    if with_downsample:
        wd = conv_w(next(ks), planes * EXPANSION, inplanes, 1)
        p['wd'] = wd.reshape(planes * EXPANSION, inplanes).T.astype(jnp.bfloat16)
        p['bnd_g'] = jnp.ones((planes * EXPANSION,), jnp.float32)
        p['bnd_b'] = jnp.zeros((planes * EXPANSION,), jnp.float32)
    return p


# ----------------------------------------------------------------------------
if __name__ == "__main__":
    key = jax.random.PRNGKey(0)
    kp1, kp2, kx1, kx2 = jax.random.split(key, 4)

    # Case 1: identity shortcut (stride=1, inplanes == planes * 4).
    p_id = init_bottleneck_params(kp1, inplanes=64, planes=16, stride=1)
    x1 = jax.random.normal(kx1, (2, 64, 16, 16, 16), jnp.float32)
    y1 = jax.block_until_ready(bottleneck_forward(x1, p_id))
    assert y1.shape == (2, 64, 16, 16, 16), y1.shape

    # Case 2: projection shortcut (stride=2 downsample conv 1x1x1 + BN).
    p_ds = init_bottleneck_params(kp2, inplanes=32, planes=16, stride=2)
    x2 = jax.random.normal(kx2, (2, 32, 16, 16, 16), jnp.float32)
    y2 = jax.block_until_ready(bottleneck_forward(x2, p_ds))
    assert y2.shape == (2, 64, 8, 8, 8), y2.shape

    assert bool(jnp.all(jnp.isfinite(y1))) and bool(jnp.all(jnp.isfinite(y2)))
    print("KERNEL_OK")
</pallas_src>

<mosaic_0001>
module attributes {stable_mosaic.version = 11 : i64} {
  func.func @_mm_stats_kernel(%arg0: i32, %arg1: i32, %arg2: i32, %arg3: memref<256x128xbf16, #tpu.memory_space<vmem>>, %arg4: memref<128x128xbf16, #tpu.memory_space<vmem>>, %arg5: memref<256x128xf32, #tpu.memory_space<vmem>>, %arg6: memref<1x2x128xf32, #tpu.memory_space<vmem>>, %arg7: memref<256x128xf32, #tpu.memory_space<vmem>>) attributes {dimension_semantics = [#tpu.dimension_semantics<parallel>, #tpu.dimension_semantics<parallel>, #tpu.dimension_semantics<arbitrary>], iteration_bounds = array<i64: 32, 1, 1>, scalar_prefetch = 0 : i64, scratch_operands = 1 : i64, tpu.core_type = #tpu.core_type<tc>, window_params = [{transform_indices = @transform_0, window_bounds = array<i64: 256, 128>}, {transform_indices = @transform_1, window_bounds = array<i64: 128, 128>}, {transform_indices = @transform_2, window_bounds = array<i64: 256, 128>}, {transform_indices = @transform_3, window_bounds = array<i64: 1, 2, 128>}]} {
    %c0_i32 = arith.constant 0 : i32
    %0 = arith.cmpi eq, %arg2, %c0_i32 : i32
    %1 = arith.extui %0 : i1 to i32
    %c0_i32_0 = arith.constant 0 : i32
    %2 = arith.cmpi ne, %1, %c0_i32_0 : i32
    scf.if %2 {
      %cst_10 = arith.constant 0.000000e+00 : f32
      %12 = vector.broadcast %cst_10 : f32 to vector<256x128xf32>
      %c0_11 = arith.constant 0 : index
      %c0_12 = arith.constant 0 : index
      %13 = vector.load %arg7[%c0_11, %c0_12] : memref<256x128xf32, #tpu.memory_space<vmem>>, vector<256x128xf32>
      tpu.vector_store %arg7[%c0_11, %c0_12], %12 {strides = array<i32>} : memref<256x128xf32, #tpu.memory_space<vmem>>, vector<256x128xf32>,
    } else {
    }
    %c0 = arith.constant 0 : index
    %c0_1 = arith.constant 0 : index
    %3 = vector.load %arg7[%c0, %c0_1] : memref<256x128xf32, #tpu.memory_space<vmem>>, vector<256x128xf32>
    %c0_2 = arith.constant 0 : index
    %c0_3 = arith.constant 0 : index
    %4 = vector.load %arg3[%c0_2, %c0_3] : memref<256x128xbf16, #tpu.memory_space<vmem>>, vector<256x128xbf16>
    %c0_4 = arith.constant 0 : index
    %c0_5 = arith.constant 0 : index
    %5 = vector.load %arg4[%c0_4, %c0_5] : memref<128x128xbf16, #tpu.memory_space<vmem>>, vector<128x128xbf16>
    %cst = arith.constant dense<0.000000e+00> : vector<256x128xf32>
    %6 = tpu.matmul %4, %5, %cst {dimension_numbers = #tpu.dot_dimension_numbers<[1], [0], [0], [1], [0, 0, 1, 1], [], []>} : vector<256x128xbf16>, vector<128x128xbf16>, vector<256x128xf32> -> vector<256x128xf32>
    %7 = arith.addf %3, %6 : vector<256x128xf32>
    %c0_6 = arith.constant 0 : index
    %c0_7 = arith.constant 0 : index
    %8 = vector.load %arg7[%c0_6, %c0_7] : memref<256x128xf32, #tpu.memory_space<vmem>>, vector<256x128xf32>
    tpu.vector_store %arg7[%c0_6, %c0_7], %7 {strides = array<i32>} : memref<256x128xf32, #tpu.memory_space<vmem>>, vector<256x128xf32>,
    %c0_i32_8 = arith.constant 0 : i32
    %9 = arith.cmpi eq, %arg2, %c0_i32_8 : i32
    %10 = arith.extui %9 : i1 to i32
    %c0_i32_9 = arith.constant 0 : i32
    %11 = arith.cmpi ne, %10, %c0_i32_9 : i32
    scf.if %11 {
      %c0_10 = arith.constant 0 : index
      %c0_11 = arith.constant 0 : index
      %12 = vector.load %arg7[%c0_10, %c0_11] : memref<256x128xf32, #tpu.memory_space<vmem>>, vector<256x128xf32>
      %c0_12 = arith.constant 0 : index
      %c0_13 = arith.constant 0 : index
      %13 = vector.load %arg5[%c0_12, %c0_13] : memref<256x128xf32, #tpu.memory_space<vmem>>, vector<256x128xf32>
      tpu.vector_store %arg5[%c0_12, %c0_13], %12 {strides = array<i32>} : memref<256x128xf32, #tpu.memory_space<vmem>>, vector<256x128xf32>,
      %cst_14 = arith.constant dense<0.000000e+00> : vector<128xf32>
      %14 = vector.multi_reduction <add>, %12, %cst_14 [0] : vector<256x128xf32> to vector<128xf32>
      %15 = vector.shape_cast %14 : vector<128xf32> to vector<1x128xf32>
      %16 = arith.mulf %12, %12 : vector<256x128xf32>
      %cst_15 = arith.constant dense<0.000000e+00> : vector<128xf32>
      %17 = vector.multi_reduction <add>, %16, %cst_15 [0] : vector<256x128xf32> to vector<128xf32>
      %18 = vector.shape_cast %17 : vector<128xf32> to vector<1x128xf32>
      %19 = tpu.concatenate %15, %18 in 0 : vector<1x128xf32>, vector<1x128xf32> -> vector<2x128xf32>
      %20 = vector.shape_cast %19 : vector<2x128xf32> to vector<1x2x128xf32>
      %c0_16 = arith.constant 0 : index
      %c0_17 = arith.constant 0 : index
      %c0_18 = arith.constant 0 : index
      %21 = vector.load %arg6[%c0_16, %c0_17, %c0_18] : memref<1x2x128xf32, #tpu.memory_space<vmem>>, vector<1x2x128xf32>
      tpu.vector_store %arg6[%c0_16, %c0_17, %c0_18], %20 {strides = array<i32>} : memref<1x2x128xf32, #tpu.memory_space<vmem>>, vector<1x2x128xf32>,
    } else {
    }
    return
  }
  func.func @transform_0(%arg0: i32, %arg1: i32, %arg2: i32) -> (i32, i32) {
    %c0_i32 = arith.constant 0 : i32
    return %arg0, %arg2 : i32, i32
  }
  func.func @transform_1(%arg0: i32, %arg1: i32, %arg2: i32) -> (i32, i32) {
    %c0_i32 = arith.constant 0 : i32
    return %arg2, %arg1 : i32, i32
  }
  func.func @transform_2(%arg0: i32, %arg1: i32, %arg2: i32) -> (i32, i32) {
    %c0_i32 = arith.constant 0 : i32
    return %arg0, %arg1 : i32, i32
  }
  func.func @transform_3(%arg0: i32, %arg1: i32, %arg2: i32) -> (i32, i32, i32) {
    %c0_i32 = arith.constant 0 : i32
    %c0_i32_0 = arith.constant 0 : i32
    return %arg0, %c0_i32, %arg1 : i32, i32, i32
  }
}

</mosaic_0001>

<llo_original>
// kernel: tpu_custom_call.1
$region0: #{tpu_custom_call.1}
  #allocation0 [shape = 'u32[]', space=smem, size = 0x4, offset = 0x4, fixed_abs, tag = 'smem constant byte address 0x4 - core index']
  #allocation1 [shape = 'u32[72,128]{1,0:T(1,128)}', space=vmem, size = 0x9000, scoped, tag = 'internal scratch']
  #allocation2 [shape = 'f32[256,128]{1,0:T(8,128)}', space=vmem, size = 0x20000, scoped, tag = 'scratch operand']
  %s0 = inlined_call_operand.hbm [shape: bf16[8192,128], index: 0, kind: input, shape index: {}]
  %s1 = inlined_call_operand.hbm [shape: bf16[128,128], index: 1, kind: input, shape index: {}]
  %s2 = inlined_call_operand.hbm [shape: f32[8192,128], index: 2, kind: output, shape index: {0}]
  %s3 = inlined_call_operand.hbm [shape: f32[32,2,128], index: 3, kind: output, shape index: {1}]
  %4 = xla_tuple %s2, %s3
  %s5 = sld [smem:[#allocation0]]
  $region65: #{tpu_custom_call.1} parent=0
    _
  %s7 = ssub.s32 1, %s5
  %s8 = scalar_select 0, %s7, %s5
  $region1: #{tpu_custom_call.1} parent=0
    #allocation3 [shape = 'u8[131072]{0}', space=vmem, size = 0x20000, scoped, tag = 'input window, operand 0']
    #allocation4 [shape = 's32[2]{0}', space=sflag, size = 0x8, scoped, tag = 'scoped memory for tpu_custom_call.1']
    #allocation5 [shape = 's32[2]{0}', space=sflag, size = 0x8, scoped, tag = 'scoped memory for tpu_custom_call.1']
    #allocation6 [shape = 'u8[32768]{0}', space=vmem, size = 0x8000, scoped, tag = 'input window, operand 1, single buffered']
    #allocation7 [shape = 's32[1]{0}', space=sflag, size = 0x4, scoped, tag = 'scoped memory for tpu_custom_call.1']
    #allocation8 [shape = 'u8[262144]{0}', space=vmem, size = 0x40000, scoped, tag = 'output window, operand 0']
    #allocation9 [shape = 'u8[2048]{0}', space=vmem, size = 0x800, scoped, tag = 'output window, operand 1']
    #allocation10 [shape = 's32[2]{0}', space=sflag, size = 0x8, scoped, tag = 'scoped memory for tpu_custom_call.1']
    %9 = vsyncpa [#allocation4], 0
    %s10 = scalar_lea.sflag [#allocation4], 1
    %11 = vsyncpa %s10, 0
    %12 = vsyncpa [#allocation7], 0
    %13 = vsyncpa [#allocation5], 0
    %s14 = scalar_lea.sflag [#allocation5], 1
    %15 = vsyncpa %s14, 0
    %16 = vsyncpa [#allocation10], 0
    %s17 = scalar_lea.sflag [#allocation10], 1
    %18 = vsyncpa %s17, 0
    loop: start=0, step=1, limit=34
    $region2: #{tpu_custom_call.1} parent=1 // loop_pre_header
      _
    $region3: #{tpu_custom_call.1} parent=1 // loop_header
      %s20 = sphi 0, %s24
      %p21 = scmp.ge.s32.totalorder %s20, 34
      %s27 = sphi 0, %s46
      %s28 = sphi 0, %s42
      %s29 = sphi 0, %s38
      %s30 = sphi 0, %s27
      %s31 = sphi 0, %s28
      %s32 = sphi 0, %s29
      %s33 = sphi 0, %s30
      %s34 = sphi 0, %s31
      %s35 = sphi 0, %s32
      %s51 = sphi 0, %s53
      %s54 = sphi 0, %s51
      %s55 = sphi 0, %s54
      %s71 = sphi 0, %s55
      %s79 = sphi 0, %s81
      %s82 = sphi 0, %s79
      %s83 = sphi 0, %s82
      %s99 = sphi 0, %s83
      %s107 = sphi 0, %s109
      %s110 = sphi 0, %s107
      %s111 = sphi 0, %s110
      %s127 = sphi 0, %s111
      %s135 = sphi 0, %s137
      %s138 = sphi 0, %s135
      %s139 = sphi 0, %s138
      %s155 = sphi 0, %s139
    $region4: #{tpu_custom_call.1} parent=1 // loop_header_branch
      %23 = sbr.rel (%p21) target = $region8
    $region5: #{tpu_custom_call.1} parent=1 // loop_body
      %s25 = ssub.s32 %s20, 1
      %s26 = ssub.s32 %s20, 2
      %s36 = sadd.s32 1, %s29
      %p37 = scmp.ge.s32.totalorder %s36, 1
      %s38 = scalar_select %p37, 0, %s36
      %s39 = sadd.s32 1, %s28
      %s40 = scalar_select %p37, %s39, %s28
      %p41 = scmp.ge.s32.totalorder %s40, 1
      %s42 = scalar_select %p41, 0, %s40
      %s43 = sadd.s32 1, %s27
      %s44 = scalar_select %p41, %s43, %s27
      %p45 = scmp.ge.s32.totalorder %s44, 32
      %s46 = scalar_select %p45, 0, %s44
      %s47 = ssub.s32 %s27, %s46
      %s48 = ssub.s32 %s29, %s38
      %s49 = sor.u32 %s47, %s48
      %p50 = scmp.eq.s32.totalorder %s49, 0
      %s52 = sadd.s32 %s51, 1
      %s53 = scalar_select %p50, %s51, %s52
      %p56 = pneg %p50
      %p57 = scmp.eq.s32.totalorder %s20, 31
      %p58 = por %p56, %p57
      %p59 = scmp.ne.s32.totalorder %s51, %s54
      %p60 = scmp.eq.s32.totalorder %s20, 0
      %p61 = por %p59, %p60
      %p62 = scmp.ne.s32.totalorder %s51, %s54
      %p63 = scmp.eq.s32.totalorder %s25, 31
      %p64 = por %p62, %p63
      %p65 = scmp.ne.s32.totalorder %s54, %s55
      %p66 = scmp.eq.s32.totalorder %s25, 0
      %p67 = por %p65, %p66
      %p68 = scmp.ne.s32.totalorder %s54, %s55
      %p69 = scmp.eq.s32.totalorder %s26, 31
      %p70 = por %p68, %p69
      %p72 = scmp.ne.s32.totalorder %s55, %s71
      %p73 = scmp.eq.s32.totalorder %s26, 0
      %p74 = por %p72, %p73
      %s75 = ssub.s32 %s29, %s38
      %s76 = ssub.s32 %s28, %s42
      %s77 = sor.u32 %s75, %s76
      %p78 = scmp.eq.s32.totalorder %s77, 0
      %s80 = sadd.s32 %s79, 1
      %s81 = scalar_select %p78, %s79, %s80
      %p84 = pneg %p78
      %p85 = scmp.eq.s32.totalorder %s20, 31
      %p86 = por %p84, %p85
      %p87 = scmp.ne.s32.totalorder %s79, %s82
      %p88 = scmp.eq.s32.totalorder %s20, 0
      %p89 = por %p87, %p88
      %p90 = scmp.ne.s32.totalorder %s79, %s82
      %p91 = scmp.eq.s32.totalorder %s25, 31
      %p92 = por %p90, %p91
      %p93 = scmp.ne.s32.totalorder %s82, %s83
      %p94 = scmp.eq.s32.totalorder %s25, 0
      %p95 = por %p93, %p94
      %p96 = scmp.ne.s32.totalorder %s82, %s83
      %p97 = scmp.eq.s32.totalorder %s26, 31
      %p98 = por %p96, %p97
      %p100 = scmp.ne.s32.totalorder %s83, %s99
      %p101 = scmp.eq.s32.totalorder %s26, 0
      %p102 = por %p100, %p101
      %s103 = ssub.s32 %s27, %s46
      %s104 = ssub.s32 %s28, %s42
      %s105 = sor.u32 %s103, %s104
      %p106 = scmp.eq.s32.totalorder %s105, 0
      %s108 = sadd.s32 %s107, 1
      %s109 = scalar_select %p106, %s107, %s108
      %p112 = pneg %p106
      %p113 = scmp.eq.s32.totalorder %s20, 31
      %p114 = por %p112, %p113
      %p115 = scmp.ne.s32.totalorder %s107, %s110
      %p116 = scmp.eq.s32.totalorder %s20, 0
      %p117 = por %p115, %p116
      %p118 = scmp.ne.s32.totalorder %s107, %s110
      %p119 = scmp.eq.s32.totalorder %s25, 31
      %p120 = por %p118, %p119
      %p121 = scmp.ne.s32.totalorder %s110, %s111
      %p122 = scmp.eq.s32.totalorder %s25, 0
      %p123 = por %p121, %p122
      %p124 = scmp.ne.s32.totalorder %s110, %s111
      %p125 = scmp.eq.s32.totalorder %s26, 31
      %p126 = por %p124, %p125
      %p128 = scmp.ne.s32.totalorder %s111, %s127
      %p129 = scmp.eq.s32.totalorder %s26, 0
      %p130 = por %p128, %p129
      %s131 = ssub.s32 %s27, %s46
      %s132 = ssub.s32 %s28, %s42
      %s133 = sor.u32 %s131, %s132
      %p134 = scmp.eq.s32.totalorder %s133, 0
      %s136 = sadd.s32 %s135, 1
      %s137 = scalar_select %p134, %s135, %s136
      %p140 = pneg %p134
      %p141 = scmp.eq.s32.totalorder %s20, 31
      %p142 = por %p140, %p141
      %p143 = scmp.ne.s32.totalorder %s135, %s138
      %p144 = scmp.eq.s32.totalorder %s20, 0
      %p145 = por %p143, %p144
      %p146 = scmp.ne.s32.totalorder %s135, %s138
      %p147 = scmp.eq.s32.totalorder %s25, 31
      %p148 = por %p146, %p147
      %p149 = scmp.ne.s32.totalorder %s138, %s139
      %p150 = scmp.eq.s32.totalorder %s25, 0
      %p151 = por %p149, %p150
      %p152 = scmp.ne.s32.totalorder %s138, %s139
      %p153 = scmp.eq.s32.totalorder %s26, 31
      %p154 = por %p152, %p153
      %p156 = scmp.ne.s32.totalorder %s139, %s155
      %p157 = scmp.eq.s32.totalorder %s26, 0
      %p158 = por %p156, %p157
      %p159 = scmp.le.s32.totalorder 1, %s20
      %p160 = scmp.lt.s32.totalorder %s20, 33
      %p161 = pnand %p159, %p160
      %p162 = pneg %p161
      // Predicated region
      $region9: #{tpu_custom_call.1} parent=5 // pred_check
        _
      $region10: #{tpu_custom_call.1} parent=5 // pred_check_branch
        %164 = sbr.rel (%p161) target = $region12
      $region11: #{tpu_custom_call.1} parent=5 // pred_region
        %s165 = ssub.s32 %s20, 1
        // Predicated region
        $region13: #{tpu_custom_call.1} parent=11 // pred_check
          %p166 = pneg %p95
        $region14: #{tpu_custom_call.1} parent=11 // pred_check_branch
          %168 = sbr.rel (%p166) target = $region16
        $region15: #{tpu_custom_call.1} parent=11 // pred_region
          %s169 = smul.u32 16, %s32
          %171 = vsyncadd [#allocation7], 0
          %s172 = sadd.s32 %s31, %s169
          %s173 = smul.addr %s172, 4
          %s174 = scalar_lea.hbm %s1, %s173
          %s175 = sshll.u32 %s174, 4
          %s176 = int_to_ptr.hbm [resolvable:$true] %s175
          %s177 = sshll.u32 [#allocation6], 4
          %s178 = int_to_ptr.vmem [resolvable:$true] %s177
          %183 = dma.hbm_to_vmem [thread:$0]  %s176, 1024, %s178, [#allocation7], 64, 64, 4
        $region16: #{tpu_custom_call.1} parent=11 // pred_fallthru
          _
      $region12: #{tpu_custom_call.1} parent=5 // pred_fallthru
        _
      %p184 = scmp.lt.s32.totalorder %s20, 32
      // Predicated region
      $region17: #{tpu_custom_call.1} parent=5 // pred_check
        %p185 = pneg %p184
      $region18: #{tpu_custom_call.1} parent=5 // pred_check_branch
        %187 = sbr.rel (%p185) target = $region20
      $region19: #{tpu_custom_call.1} parent=5 // pred_region
        // Predicated region
        $region21: #{tpu_custom_call.1} parent=19 // pred_check
          %p188 = pneg %p61
        $region22: #{tpu_custom_call.1} parent=19 // pred_check_branch
          %190 = sbr.rel (%p188) target = $region24
        $region23: #{tpu_custom_call.1} parent=19 // pred_region
          %s191 = sand.u32 %s51, 1
          %s192 = scalar_lea.sflag [#allocation4], %s191
          %s193 = sand.u32 %s51, 1
          %s194 = smul.addr %s193, 128
          %s195 = scalar_lea.vmem [#allocation3], %s194
          %s196 = smul.u32 32, %s27
          %198 = vsyncadd %s192, 0
          %s199 = sadd.s32 %s29, %s196
          %s200 = smul.addr %s199, 4
          %s201 = scalar_lea.hbm %s0, %s200
          %s202 = sshll.u32 %s201, 4
          %s203 = int_to_ptr.hbm [resolvable:$true] %s202
          %s204 = sshll.u32 %s195, 4
          %s205 = int_to_ptr.vmem [resolvable:$true] %s204
          %210 = dma.hbm_to_vmem [thread:$0]  %s203, 2048, %s205, %s192, 64, 64, 4
        $region24: #{tpu_custom_call.1} parent=19 // pred_fallthru
          _
      $region20: #{tpu_custom_call.1} parent=5 // pred_fallthru
        _
      %p211 = scmp.le.s32.totalorder 1, %s20
      %p212 = scmp.lt.s32.totalorder %s20, 33
      %p213 = pnand %p211, %p212
      %p214 = pneg %p213
      // Predicated region
      $region25: #{tpu_custom_call.1} parent=5 // pred_check
        _
      $region26: #{tpu_custom_call.1} parent=5 // pred_check_branch
        %216 = sbr.rel (%p213) target = $region28
      $region27: #{tpu_custom_call.1} parent=5 // pred_region
        %s217 = ssub.s32 %s20, 1
        %s218 = sand.u32 %s54, 1
        %s219 = scalar_lea.sflag [#allocation4], %s218
        %s220 = sand.u32 %s54, 1
        %s221 = smul.addr %s220, 128
        %s222 = scalar_lea.vmem [#allocation3], %s221
        // Predicated region
        $region29: #{tpu_custom_call.1} parent=27 // pred_check
          %p223 = pneg %p67
        $region30: #{tpu_custom_call.1} parent=27 // pred_check_branch
          %225 = sbr.rel (%p223) target = $region32
        $region31: #{tpu_custom_call.1} parent=27 // pred_region
          %227 = dma.done %s219, 2048
        $region32: #{tpu_custom_call.1} parent=27 // pred_fallthru
          _
        // Predicated region
        $region33: #{tpu_custom_call.1} parent=27 // pred_check
          %p228 = pneg %p95
        $region34: #{tpu_custom_call.1} parent=27 // pred_check_branch
          %230 = sbr.rel (%p228) target = $region36
        $region35: #{tpu_custom_call.1} parent=27 // pred_region
          %232 = dma.done [#allocation7], 1024
        $region36: #{tpu_custom_call.1} parent=27 // pred_fallthru
          _
        %s233 = sand.u32 %s54, 1
        %s234 = scalar_lea.sflag [#allocation4], %s233
        %s235 = sand.u32 %s54, 1
        %s236 = smul.addr %s235, 128
        %s237 = scalar_lea.vmem [#allocation3], %s236
        %p238 = pneg %p67
        %p239 = pneg %p64
        %p240 = pneg %p95
        %p241 = pneg %p92
        %p242 = pneg %p123
        %p243 = pneg %p120
        %s244 = sand.u32 %s110, 1
        %s245 = scalar_lea.sflag [#allocation5], %s244
        %s246 = sand.u32 %s110, 1
        %s247 = smul.addr %s246, 256
        %s248 = scalar_lea.vmem [#allocation8], %s247
        %p249 = pneg %p151
        %p250 = pneg %p148
        %s251 = sand.u32 %s138, 1
        %s252 = scalar_lea.sflag [#allocation10], %s251
        %s253 = sand.u32 %s138, 1
        %s254 = smul.addr %s253, 2
        %s255 = scalar_lea.vmem [#allocation9], %s254
        %s256 = smul.u32 32, %s30
        %s257 = smul.u32 16, %s32
        %s258 = smul.u32 32, %s30
        %p259 = scmp.eq.s32.totalorder %s32, 0
        // Predicated region
        $region37: #{tpu_custom_call.1} parent=27 // pred_check
          %p260 = pneg %p259
        $region38: #{tpu_custom_call.1} parent=27 // pred_check_branch
          %262 = sbr.rel (%p260) target = $region40
        $region39: #{tpu_custom_call.1} parent=27 // pred_region
          %263 = vst [vmem:[#allocation2] sm:$0xff] 0.0
          %264 = vst [vmem:[#allocation2 + $0x8] sm:$0xff] 0.0
          %265 = vst [vmem:[#allocation2 + $0x10] sm:$0xff] 0.0
          %266 = vst [vmem:[#allocation2 + $0x18] sm:$0xff] 0.0
          %267 = vst [vmem:[#allocation2 + $0x20] sm:$0xff] 0.0
          %268 = vst [vmem:[#allocation2 + $0x28] sm:$0xff] 0.0
          %269 = vst [vmem:[#allocation2 + $0x30] sm:$0xff] 0.0
          %270 = vst [vmem:[#allocation2 + $0x38] sm:$0xff] 0.0
          %271 = vst [vmem:[#allocation2 + $0x40] sm:$0xff] 0.0
          %272 = vst [vmem:[#allocation2 + $0x48] sm:$0xff] 0.0
          %273 = vst [vmem:[#allocation2 + $0x50] sm:$0xff] 0.0
          %274 = vst [vmem:[#allocation2 + $0x58] sm:$0xff] 0.0
          %275 = vst [vmem:[#allocation2 + $0x60] sm:$0xff] 0.0
          %276 = vst [vmem:[#allocation2 + $0x68] sm:$0xff] 0.0
          %277 = vst [vmem:[#allocation2 + $0x70] sm:$0xff] 0.0
          %278 = vst [vmem:[#allocation2 + $0x78] sm:$0xff] 0.0
          %279 = vst [vmem:[#allocation2 + $0x80] sm:$0xff] 0.0
          %280 = vst [vmem:[#allocation2 + $0x88] sm:$0xff] 0.0
          %281 = vst [vmem:[#allocation2 + $0x90] sm:$0xff] 0.0
          %282 = vst [vmem:[#allocation2 + $0x98] sm:$0xff] 0.0
          %283 = vst [vmem:[#allocation2 + $0xa0] sm:$0xff] 0.0
          %284 = vst [vmem:[#allocation2 + $0xa8] sm:$0xff] 0.0
          %285 = vst [vmem:[#allocation2 + $0xb0] sm:$0xff] 0.0
          %286 = vst [vmem:[#allocation2 + $0xb8] sm:$0xff] 0.0
          %287 = vst [vmem:[#allocation2 + $0xc0] sm:$0xff] 0.0
          %288 = vst [vmem:[#allocation2 + $0xc8] sm:$0xff] 0.0
          %289 = vst [vmem:[#allocation2 + $0xd0] sm:$0xff] 0.0
          %290 = vst [vmem:[#allocation2 + $0xd8] sm:$0xff] 0.0
          %291 = vst [vmem:[#allocation2 + $0xe0] sm:$0xff] 0.0
          %292 = vst [vmem:[#allocation2 + $0xe8] sm:$0xff] 0.0
          %293 = vst [vmem:[#allocation2 + $0xf0] sm:$0xff] 0.0
          %294 = vst [vmem:[#allocation2 + $0xf8] sm:$0xff] 0.0
        $region40: #{tpu_custom_call.1} parent=27 // pred_fallthru
          _
        %v295 = vld [vmem:[#allocation2] sm:$0xff]
        %v296 = vld [vmem:[#allocation2 + $0x8] sm:$0xff]
        %v297 = vld [vmem:[#allocation2 + $0x10] sm:$0xff]
        %v298 = vld [vmem:[#allocation2 + $0x18] sm:$0xff]
        %v299 = vld [vmem:[#allocation2 + $0x20] sm:$0xff]
        %v300 = vld [vmem:[#allocation2 + $0x28] sm:$0xff]
        %v301 = vld [vmem:[#allocation2 + $0x30] sm:$0xff]
        %v302 = vld [vmem:[#allocation2 + $0x38] sm:$0xff]
        %v303 = vld [vmem:[#allocation2 + $0x40] sm:$0xff]
        %v304 = vld [vmem:[#allocation2 + $0x48] sm:$0xff]
        %v305 = vld [vmem:[#allocation2 + $0x50] sm:$0xff]
        %v306 = vld [vmem:[#allocation2 + $0x58] sm:$0xff]
        %v307 = vld [vmem:[#allocation2 + $0x60] sm:$0xff]
        %v308 = vld [vmem:[#allocation2 + $0x68] sm:$0xff]
        %v309 = vld [vmem:[#allocation2 + $0x70] sm:$0xff]
        %v310 = vld [vmem:[#allocation2 + $0x78] sm:$0xff]
        %v311 = vld [vmem:[#allocation2 + $0x80] sm:$0xff]
        %v312 = vld [vmem:[#allocation2 + $0x88] sm:$0xff]
        %v313 = vld [vmem:[#allocation2 + $0x90] sm:$0xff]
        %v314 = vld [vmem:[#allocation2 + $0x98] sm:$0xff]
        %v315 = vld [vmem:[#allocation2 + $0xa0] sm:$0xff]
        %v316 = vld [vmem:[#allocation2 + $0xa8] sm:$0xff]
        %v317 = vld [vmem:[#allocation2 + $0xb0] sm:$0xff]
        %v318 = vld [vmem:[#allocation2 + $0xb8] sm:$0xff]
        %v319 = vld [vmem:[#allocation2 + $0xc0] sm:$0xff]
        %v320 = vld [vmem:[#allocation2 + $0xc8] sm:$0xff]
        %v321 = vld [vmem:[#allocation2 + $0xd0] sm:$0xff]
        %v322 = vld [vmem:[#allocation2 + $0xd8] sm:$0xff]
        %v323 = vld [vmem:[#allocation2 + $0xe0] sm:$0xff]
        %v324 = vld [vmem:[#allocation2 + $0xe8] sm:$0xff]
        %v325 = vld [vmem:[#allocation2 + $0xf0] sm:$0xff]
        %v326 = vld [vmem:[#allocation2 + $0xf8] sm:$0xff]
        %v327 = vld [vmem:[%s222] sm:$0xf]
        %v328 = vld [vmem:[%s222 + $0x4] sm:$0xf]
        %v329 = vld [vmem:[%s222 + $0x8] sm:$0xf]
        %v330 = vld [vmem:[%s222 + $0xc] sm:$0xf]
        %v331 = vld [vmem:[%s222 + $0x10] sm:$0xf]
        %v332 = vld [vmem:[%s222 + $0x14] sm:$0xf]
        %v333 = vld [vmem:[%s222 + $0x18] sm:$0xf]
        %v334 = vld [vmem:[%s222 + $0x1c] sm:$0xf]
        %v335 = vld [vmem:[%s222 + $0x20] sm:$0xf]
        %v336 = vld [vmem:[%s222 + $0x24] sm:$0xf]
        %v337 = vld [vmem:[%s222 + $0x28] sm:$0xf]
        %v338 = vld [vmem:[%s222 + $0x2c] sm:$0xf]
        %v339 = vld [vmem:[%s222 + $0x30] sm:$0xf]
        %v340 = vld [vmem:[%s222 + $0x34] sm:$0xf]
        %v341 = vld [vmem:[%s222 + $0x38] sm:$0xf]
        %v342 = vld [vmem:[%s222 + $0x3c] sm:$0xf]
        %v343 = vld [vmem:[%s222 + $0x40] sm:$0xf]
        %v344 = vld [vmem:[%s222 + $0x44] sm:$0xf]
        %v345 = vld [vmem:[%s222 + $0x48] sm:$0xf]
        %v346 = vld [vmem:[%s222 + $0x4c] sm:$0xf]
        %v347 = vld [vmem:[%s222 + $0x50] sm:$0xf]
        %v348 = vld [vmem:[%s222 + $0x54] sm:$0xf]
        %v349 = vld [vmem:[%s222 + $0x58] sm:$0xf]
        %v350 = vld [vmem:[%s222 + $0x5c] sm:$0xf]
        %v351 = vld [vmem:[%s222 + $0x60] sm:$0xf]
        %v352 = vld [vmem:[%s222 + $0x64] sm:$0xf]
        %v353 = vld [vmem:[%s222 + $0x68] sm:$0xf]
        %v354 = vld [vmem:[%s222 + $0x6c] sm:$0xf]
        %v355 = vld [vmem:[%s222 + $0x70] sm:$0xf]
        %v356 = vld [vmem:[%s222 + $0x74] sm:$0xf]
        %v357 = vld [vmem:[%s222 + $0x78] sm:$0xf]
        %v358 = vld [vmem:[%s222 + $0x7c] sm:$0xf]
        %v359 = vld [vmem:[#allocation6] sm:$0xf]
        %v360 = vld [vmem:[#allocation6 + $0x4] sm:$0xf]
        %v361 = vld [vmem:[#allocation6 + $0x8] sm:$0xf]
        %v362 = vld [vmem:[#allocation6 + $0xc] sm:$0xf]
        %v363 = vld [vmem:[#allocation6 + $0x10] sm:$0xf]
        %v364 = vld [vmem:[#allocation6 + $0x14] sm:$0xf]
        %v365 = vld [vmem:[#allocation6 + $0x18] sm:$0xf]
        %v366 = vld [vmem:[#allocation6 + $0x1c] sm:$0xf]
        %v367 = vld [vmem:[#allocation6 + $0x20] sm:$0xf]
        %v368 = vld [vmem:[#allocation6 + $0x24] sm:$0xf]
        %v369 = vld [vmem:[#allocation6 + $0x28] sm:$0xf]
        %v370 = vld [vmem:[#allocation6 + $0x2c] sm:$0xf]
        %v371 = vld [vmem:[#allocation6 + $0x30] sm:$0xf]
        %v372 = vld [vmem:[#allocation6 + $0x34] sm:$0xf]
        %v373 = vld [vmem:[#allocation6 + $0x38] sm:$0xf]
        %v374 = vld [vmem:[#allocation6 + $0x3c] sm:$0xf]
        %v407 = vunpack.c.l.b16 %v327
        %v408 = vunpack.c.l.b16 %v328
        %v409 = vunpack.c.l.b16 %v329
        %v410 = vunpack.c.l.b16 %v330
        %v411 = vunpack.c.l.b16 %v331
        %v412 = vunpack.c.l.b16 %v332
        %v413 = vunpack.c.l.b16 %v333
        %v414 = vunpack.c.l.b16 %v334
        %v415 = vunpack.c.l.b16 %v335
        %v416 = vunpack.c.l.b16 %v336
        %v417 = vunpack.c.l.b16 %v337
        %v418 = vunpack.c.l.b16 %v338
        %v419 = vunpack.c.l.b16 %v339
        %v420 = vunpack.c.l.b16 %v340
        %v421 = vunpack.c.l.b16 %v341
        %v422 = vunpack.c.l.b16 %v342
        %v423 = vunpack.c.l.b16 %v343
        %v424 = vunpack.c.l.b16 %v344
        %v425 = vunpack.c.l.b16 %v345
        %v426 = vunpack.c.l.b16 %v346
        %v427 = vunpack.c.l.b16 %v347
        %v428 = vunpack.c.l.b16 %v348
        %v429 = vunpack.c.l.b16 %v349
        %v430 = vunpack.c.l.b16 %v350
        %v431 = vunpack.c.l.b16 %v351
        %v432 = vunpack.c.l.b16 %v352
        %v433 = vunpack.c.l.b16 %v353
        %v434 = vunpack.c.l.b16 %v354
        %v435 = vunpack.c.l.b16 %v355
        %v436 = vunpack.c.l.b16 %v356
        %v437 = vunpack.c.l.b16 %v357
        %v438 = vunpack.c.l.b16 %v358
        %v439 = vpack.c.b16 %v408, %v407
        %v440 = vpack.c.b16 %v410, %v409
        %v441 = vpack.c.b16 %v412, %v411
        %v442 = vpack.c.b16 %v414, %v413
        %v443 = vpack.c.b16 %v416, %v415
        %v444 = vpack.c.b16 %v418, %v417
        %v445 = vpack.c.b16 %v420, %v419
        %v446 = vpack.c.b16 %v422, %v421
        %v447 = vpack.c.b16 %v424, %v423
        %v448 = vpack.c.b16 %v426, %v425
        %v449 = vpack.c.b16 %v428, %v427
        %v450 = vpack.c.b16 %v430, %v429
        %v451 = vpack.c.b16 %v432, %v431
        %v452 = vpack.c.b16 %v434, %v433
        %v453 = vpack.c.b16 %v436, %v435
        %v454 = vpack.c.b16 %v438, %v437
        %v487 = vunpack.c.l.b16 %v359
        %v488 = vunpack.c.l.b16 %v360
        %v489 = vunpack.c.l.b16 %v361
        %v490 = vunpack.c.l.b16 %v362
        %v491 = vunpack.c.l.b16 %v363
        %v492 = vunpack.c.l.b16 %v364
        %v493 = vunpack.c.l.b16 %v365
        %v494 = vunpack.c.l.b16 %v366
        %v495 = vunpack.c.l.b16 %v367
        %v496 = vunpack.c.l.b16 %v368
        %v497 = vunpack.c.l.b16 %v369
        %v498 = vunpack.c.l.b16 %v370
        %v499 = vunpack.c.l.b16 %v371
        %v500 = vunpack.c.l.b16 %v372
        %v501 = vunpack.c.l.b16 %v373
        %v502 = vunpack.c.l.b16 %v374
        %v503 = vpack.c.b16 %v488, %v487
        %v504 = vpack.c.b16 %v490, %v489
        %v505 = vpack.c.b16 %v492, %v491
        %v506 = vpack.c.b16 %v494, %v493
        %v507 = vpack.c.b16 %v496, %v495
        %v508 = vpack.c.b16 %v498, %v497
        %v509 = vpack.c.b16 %v500, %v499
        %v510 = vpack.c.b16 %v502, %v501
        %519 = vmatpush.bf16.msra.mxu0 %v510
        %520 = vmatpush.bf16.msra.mxu0 %v509
        %521 = vmatpush.bf16.msra.mxu0 %v508
        %522 = vmatpush.bf16.msra.mxu0 %v507
        %523 = vmatpush.bf16.msra.mxu0 %v506
        %524 = vmatpush.bf16.msra.mxu0 %v505
        %525 = vmatpush.bf16.msra.mxu0 %v504
        %526 = vmatpush.bf16.msra.mxu0 %v503
        %527 = vmatmul.bf16.gmra.mxu0 %v439
        %v528 = vpop.f32.mrf.mxu0
        %v529 = vadd.f32 0.0, %v528
        %v530 = vpop.f32.mrf.mxu0
        %v531 = vadd.f32 0.0, %v530
        %532 = vmatmul.bf16.gmra.mxu0 %v440
        %v533 = vpop.f32.mrf.mxu0
        %v534 = vadd.f32 0.0, %v533
        %v535 = vpop.f32.mrf.mxu0
        %v536 = vadd.f32 0.0, %v535
        %537 = vmatmul.bf16.gmra.mxu0 %v441
        %v538 = vpop.f32.mrf.mxu0
        %v539 = vadd.f32 0.0, %v538
        %v540 = vpop.f32.mrf.mxu0
        %v541 = vadd.f32 0.0, %v540
        %542 = vmatmul.bf16.gmra.mxu0 %v442
        %v543 = vpop.f32.mrf.mxu0
        %v544 = vadd.f32 0.0, %v543
        %v545 = vpop.f32.mrf.mxu0
        %v546 = vadd.f32 0.0, %v545
        %547 = vmatmul.bf16.gmra.mxu0 %v443
        %v548 = vpop.f32.mrf.mxu0
        %v549 = vadd.f32 0.0, %v548
        %v550 = vpop.f32.mrf.mxu0
        %v551 = vadd.f32 0.0, %v550
        %552 = vmatmul.bf16.gmra.mxu0 %v444
        %v553 = vpop.f32.mrf.mxu0
        %v554 = vadd.f32 0.0, %v553
        %v555 = vpop.f32.mrf.mxu0
        %v556 = vadd.f32 0.0, %v555
        %557 = vmatmul.bf16.gmra.mxu0 %v445
        %v558 = vpop.f32.mrf.mxu0
        %v559 = vadd.f32 0.0, %v558
        %v560 = vpop.f32.mrf.mxu0
        %v561 = vadd.f32 0.0, %v560
        %562 = vmatmul.bf16.gmra.mxu0 %v446
        %v563 = vpop.f32.mrf.mxu0
        %v564 = vadd.f32 0.0, %v563
        %v565 = vpop.f32.mrf.mxu0
        %v566 = vadd.f32 0.0, %v565
        %567 = vmatmul.bf16.gmra.mxu0 %v447
        %v568 = vpop.f32.mrf.mxu0
        %v569 = vadd.f32 0.0, %v568
        %v570 = vpop.f32.mrf.mxu0
        %v571 = vadd.f32 0.0, %v570
        %572 = vmatmul.bf16.gmra.mxu0 %v448
        %v573 = vpop.f32.mrf.mxu0
        %v574 = vadd.f32 0.0, %v573
        %v575 = vpop.f32.mrf.mxu0
        %v576 = vadd.f32 0.0, %v575
        %577 = vmatmul.bf16.gmra.mxu0 %v449
        %v578 = vpop.f32.mrf.mxu0
        %v579 = vadd.f32 0.0, %v578
        %v580 = vpop.f32.mrf.mxu0
        %v581 = vadd.f32 0.0, %v580
        %582 = vmatmul.bf16.gmra.mxu0 %v450
        %v583 = vpop.f32.mrf.mxu0
        %v584 = vadd.f32 0.0, %v583
        %v585 = vpop.f32.mrf.mxu0
        %v586 = vadd.f32 0.0, %v585
        %587 = vmatmul.bf16.gmra.mxu0 %v451
        %v588 = vpop.f32.mrf.mxu0
        %v589 = vadd.f32 0.0, %v588
        %v590 = vpop.f32.mrf.mxu0
        %v591 = vadd.f32 0.0, %v590
        %592 = vmatmul.bf16.gmra.mxu0 %v452
        %v593 = vpop.f32.mrf.mxu0
        %v594 = vadd.f32 0.0, %v593
        %v595 = vpop.f32.mrf.mxu0
        %v596 = vadd.f32 0.0, %v595
        %597 = vmatmul.bf16.gmra.mxu0 %v453
        %v598 = vpop.f32.mrf.mxu0
        %v599 = vadd.f32 0.0, %v598
        %v600 = vpop.f32.mrf.mxu0
        %v601 = vadd.f32 0.0, %v600
        %602 = vmatmul.bf16.gmra.mxu0 %v454
        %v603 = vpop.f32.mrf.mxu0
        %v604 = vadd.f32 0.0, %v603
        %v605 = vpop.f32.mrf.mxu0
        %v606 = vadd.f32 0.0, %v605
        %607 = vdwg.mxu0
        %v608 = vadd.f32 %v295, %v529
        %v609 = vadd.f32 %v296, %v531
        %v610 = vadd.f32 %v297, %v534
        %v611 = vadd.f32 %v298, %v536
        %v612 = vadd.f32 %v299, %v539
        %v613 = vadd.f32 %v300, %v541
        %v614 = vadd.f32 %v301, %v544
        %v615 = vadd.f32 %v302, %v546
        %v616 = vadd.f32 %v303, %v549
        %v617 = vadd.f32 %v304, %v551
        %v618 = vadd.f32 %v305, %v554
        %v619 = vadd.f32 %v306, %v556
        %v620 = vadd.f32 %v307, %v559
        %v621 = vadd.f32 %v308, %v561
        %v622 = vadd.f32 %v309, %v564
        %v623 = vadd.f32 %v310, %v566
        %v624 = vadd.f32 %v311, %v569
        %v625 = vadd.f32 %v312, %v571
        %v626 = vadd.f32 %v313, %v574
        %v627 = vadd.f32 %v314, %v576
        %v628 = vadd.f32 %v315, %v579
        %v629 = vadd.f32 %v316, %v581
        %v630 = vadd.f32 %v317, %v584
        %v631 = vadd.f32 %v318, %v586
        %v632 = vadd.f32 %v319, %v589
        %v633 = vadd.f32 %v320, %v591
        %v634 = vadd.f32 %v321, %v594
        %v635 = vadd.f32 %v322, %v596
        %v636 = vadd.f32 %v323, %v599
        %v637 = vadd.f32 %v324, %v601
        %v638 = vadd.f32 %v325, %v604
        %v639 = vadd.f32 %v326, %v606
        %640 = vst [vmem:[#allocation2] sm:$0xff] %v608
        %641 = vst [vmem:[#allocation2 + $0x8] sm:$0xff] %v609
        %642 = vst [vmem:[#allocation2 + $0x10] sm:$0xff] %v610
        %643 = vst [vmem:[#allocation2 + $0x18] sm:$0xff] %v611
        %644 = vst [vmem:[#allocation2 + $0x20] sm:$0xff] %v612
        %645 = vst [vmem:[#allocation2 + $0x28] sm:$0xff] %v613
        %646 = vst [vmem:[#allocation2 + $0x30] sm:$0xff] %v614
        %647 = vst [vmem:[#allocation2 + $0x38] sm:$0xff] %v615
        %648 = vst [vmem:[#allocation2 + $0x40] sm:$0xff] %v616
        %649 = vst [vmem:[#allocation2 + $0x48] sm:$0xff] %v617
        %650 = vst [vmem:[#allocation2 + $0x50] sm:$0xff] %v618
        %651 = vst [vmem:[#allocation2 + $0x58] sm:$0xff] %v619
        %652 = vst [vmem:[#allocation2 + $0x60] sm:$0xff] %v620
        %653 = vst [vmem:[#allocation2 + $0x68] sm:$0xff] %v621
        %654 = vst [vmem:[#allocation2 + $0x70] sm:$0xff] %v622
        %655 = vst [vmem:[#allocation2 + $0x78] sm:$0xff] %v623
        %656 = vst [vmem:[#allocation2 + $0x80] sm:$0xff] %v624
        %657 = vst [vmem:[#allocation2 + $0x88] sm:$0xff] %v625
        %658 = vst [vmem:[#allocation2 + $0x90] sm:$0xff] %v626
        %659 = vst [vmem:[#allocation2 + $0x98] sm:$0xff] %v627
        %660 = vst [vmem:[#allocation2 + $0xa0] sm:$0xff] %v628
        %661 = vst [vmem:[#allocation2 + $0xa8] sm:$0xff] %v629
        %662 = vst [vmem:[#allocation2 + $0xb0] sm:$0xff] %v630
        %663 = vst [vmem:[#allocation2 + $0xb8] sm:$0xff] %v631
        %664 = vst [vmem:[#allocation2 + $0xc0] sm:$0xff] %v632
        %665 = vst [vmem:[#allocation2 + $0xc8] sm:$0xff] %v633
        %666 = vst [vmem:[#allocation2 + $0xd0] sm:$0xff] %v634
        %667 = vst [vmem:[#allocation2 + $0xd8] sm:$0xff] %v635
        %668 = vst [vmem:[#allocation2 + $0xe0] sm:$0xff] %v636
        %669 = vst [vmem:[#allocation2 + $0xe8] sm:$0xff] %v637
        %670 = vst [vmem:[#allocation2 + $0xf0] sm:$0xff] %v638
        %671 = vst [vmem:[#allocation2 + $0xf8] sm:$0xff] %v639
        // Predicated region
        $region41: #{tpu_custom_call.1} parent=27 // pred_check
          %p672 = pneg %p259
        $region42: #{tpu_custom_call.1} parent=27 // pred_check_branch
          %674 = sbr.rel (%p672) target = $region44
        $region43: #{tpu_custom_call.1} parent=27 // pred_region
          %v675 = vld [vmem:[#allocation2] sm:$0xff]
          %v676 = vld [vmem:[#allocation2 + $0x8] sm:$0xff]
          %v677 = vld [vmem:[#allocation2 + $0x10] sm:$0xff]
          %v678 = vld [vmem:[#allocation2 + $0x18] sm:$0xff]
          %v679 = vld [vmem:[#allocation2 + $0x20] sm:$0xff]
          %v680 = vld [vmem:[#allocation2 + $0x28] sm:$0xff]
          %v681 = vld [vmem:[#allocation2 + $0x30] sm:$0xff]
          %v682 = vld [vmem:[#allocation2 + $0x38] sm:$0xff]
          %v683 = vld [vmem:[#allocation2 + $0x40] sm:$0xff]
          %v684 = vld [vmem:[#allocation2 + $0x48] sm:$0xff]
          %v685 = vld [vmem:[#allocation2 + $0x50] sm:$0xff]
          %v686 = vld [vmem:[#allocation2 + $0x58] sm:$0xff]
          %v687 = vld [vmem:[#allocation2 + $0x60] sm:$0xff]
          %v688 = vld [vmem:[#allocation2 + $0x68] sm:$0xff]
          %v689 = vld [vmem:[#allocation2 + $0x70] sm:$0xff]
          %v690 = vld [vmem:[#allocation2 + $0x78] sm:$0xff]
          %v691 = vld [vmem:[#allocation2 + $0x80] sm:$0xff]
          %v692 = vld [vmem:[#allocation2 + $0x88] sm:$0xff]
          %v693 = vld [vmem:[#allocation2 + $0x90] sm:$0xff]
          %v694 = vld [vmem:[#allocation2 + $0x98] sm:$0xff]
          %v695 = vld [vmem:[#allocation2 + $0xa0] sm:$0xff]
          %v696 = vld [vmem:[#allocation2 + $0xa8] sm:$0xff]
          %v697 = vld [vmem:[#allocation2 + $0xb0] sm:$0xff]
          %v698 = vld [vmem:[#allocation2 + $0xb8] sm:$0xff]
          %v699 = vld [vmem:[#allocation2 + $0xc0] sm:$0xff]
          %v700 = vld [vmem:[#allocation2 + $0xc8] sm:$0xff]
          %v701 = vld [vmem:[#allocation2 + $0xd0] sm:$0xff]
          %v702 = vld [vmem:[#allocation2 + $0xd8] sm:$0xff]
          %v703 = vld [vmem:[#allocation2 + $0xe0] sm:$0xff]
          %v704 = vld [vmem:[#allocation2 + $0xe8] sm:$0xff]
          %v705 = vld [vmem:[#allocation2 + $0xf0] sm:$0xff]
          %v706 = vld [vmem:[#allocation2 + $0xf8] sm:$0xff]
          %707 = vst [vmem:[%s248] sm:$0xff] %v675
          %708 = vst [vmem:[%s248 + $0x8] sm:$0xff] %v676
          %709 = vst [vmem:[%s248 + $0x10] sm:$0xff] %v677
          %710 = vst [vmem:[%s248 + $0x18] sm:$0xff] %v678
          %711 = vst [vmem:[%s248 + $0x20] sm:$0xff] %v679
          %712 = vst [vmem:[%s248 + $0x28] sm:$0xff] %v680
          %713 = vst [vmem:[%s248 + $0x30] sm:$0xff] %v681
          %714 = vst [vmem:[%s248 + $0x38] sm:$0xff] %v682
          %715 = vst [vmem:[%s248 + $0x40] sm:$0xff] %v683
          %716 = vst [vmem:[%s248 + $0x48] sm:$0xff] %v684
          %717 = vst [vmem:[%s248 + $0x50] sm:$0xff] %v685
          %718 = vst [vmem:[%s248 + $0x58] sm:$0xff] %v686
          %719 = vst [vmem:[%s248 + $0x60] sm:$0xff] %v687
          %720 = vst [vmem:[%s248 + $0x68] sm:$0xff] %v688
          %721 = vst [vmem:[%s248 + $0x70] sm:$0xff] %v689
          %722 = vst [vmem:[%s248 + $0x78] sm:$0xff] %v690
          %723 = vst [vmem:[%s248 + $0x80] sm:$0xff] %v691
          %724 = vst [vmem:[%s248 + $0x88] sm:$0xff] %v692
          %725 = vst [vmem:[%s248 + $0x90] sm:$0xff] %v693
          %726 = vst [vmem:[%s248 + $0x98] sm:$0xff] %v694
          %727 = vst [vmem:[%s248 + $0xa0] sm:$0xff] %v695
          %728 = vst [vmem:[%s248 + $0xa8] sm:$0xff] %v696
          %729 = vst [vmem:[%s248 + $0xb0] sm:$0xff] %v697
          %730 = vst [vmem:[%s248 + $0xb8] sm:$0xff] %v698
          %731 = vst [vmem:[%s248 + $0xc0] sm:$0xff] %v699
          %732 = vst [vmem:[%s248 + $0xc8] sm:$0xff] %v700
          %733 = vst [vmem:[%s248 + $0xd0] sm:$0xff] %v701
          %734 = vst [vmem:[%s248 + $0xd8] sm:$0xff] %v702
          %735 = vst [vmem:[%s248 + $0xe0] sm:$0xff] %v703
          %736 = vst [vmem:[%s248 + $0xe8] sm:$0xff] %v704
          %737 = vst [vmem:[%s248 + $0xf0] sm:$0xff] %v705
          %738 = vst [vmem:[%s248 + $0xf8] sm:$0xff] %v706
          %v739 = vadd.f32 %v675, %v676
          %v740 = vadd.f32 %v739, %v677
          %v741 = vadd.f32 %v740, %v678
          %v742 = vadd.f32 %v741, %v679
          %v743 = vadd.f32 %v742, %v680
          %v744 = vadd.f32 %v743, %v681
          %v745 = vadd.f32 %v744, %v682
          %v746 = vadd.f32 %v745, %v683
          %v747 = vadd.f32 %v746, %v684
          %v748 = vadd.f32 %v747, %v685
          %v749 = vadd.f32 %v748, %v686
          %v750 = vadd.f32 %v749, %v687
          %v751 = vadd.f32 %v750, %v688
          %v752 = vadd.f32 %v751, %v689
          %v753 = vadd.f32 %v752, %v690
          %v754 = vadd.f32 %v753, %v691
          %v755 = vadd.f32 %v754, %v692
          %v756 = vadd.f32 %v755, %v693
          %v757 = vadd.f32 %v756, %v694
          %v758 = vadd.f32 %v757, %v695
          %v759 = vadd.f32 %v758, %v696
          %v760 = vadd.f32 %v759, %v697
          %v761 = vadd.f32 %v760, %v698
          %v762 = vadd.f32 %v761, %v699
          %v763 = vadd.f32 %v762, %v700
          %v764 = vadd.f32 %v763, %v701
          %v765 = vadd.f32 %v764, %v702
          %v766 = vadd.f32 %v765, %v703
          %v767 = vadd.f32 %v766, %v704
          %v768 = vadd.f32 %v767, %v705
          %v769 = vadd.f32 %v768, %v706
          %v770 = vrot.slane %v769, 4
          %v771 = vadd.f32 %v769, %v770
          %v772 = vrot.slane %v771, 2
          %v773 = vadd.f32 %v771, %v772
          %v774 = vrot.slane %v773, 1
          %v775 = vadd.f32 %v773, %v774
          %v776 = vmul.f32 %v675, %v675
          %v777 = vmul.f32 %v676, %v676
          %v778 = vmul.f32 %v677, %v677
          %v779 = vmul.f32 %v678, %v678
          %v780 = vmul.f32 %v679, %v679
          %v781 = vmul.f32 %v680, %v680
          %v782 = vmul.f32 %v681, %v681
          %v783 = vmul.f32 %v682, %v682
          %v784 = vmul.f32 %v683, %v683
          %v785 = vmul.f32 %v684, %v684
          %v786 = vmul.f32 %v685, %v685
          %v787 = vmul.f32 %v686, %v686
          %v788 = vmul.f32 %v687, %v687
          %v789 = vmul.f32 %v688, %v688
          %v790 = vmul.f32 %v689, %v689
          %v791 = vmul.f32 %v690, %v690
          %v792 = vmul.f32 %v691, %v691
          %v793 = vmul.f32 %v692, %v692
          %v794 = vmul.f32 %v693, %v693
          %v795 = vmul.f32 %v694, %v694
          %v796 = vmul.f32 %v695, %v695
          %v797 = vmul.f32 %v696, %v696
          %v798 = vmul.f32 %v697, %v697
          %v799 = vmul.f32 %v698, %v698
          %v800 = vmul.f32 %v699, %v699
          %v801 = vmul.f32 %v700, %v700
          %v802 = vmul.f32 %v701, %v701
          %v803 = vmul.f32 %v702, %v702
          %v804 = vmul.f32 %v703, %v703
          %v805 = vmul.f32 %v704, %v704
          %v806 = vmul.f32 %v705, %v705
          %v807 = vmul.f32 %v706, %v706
          %v808 = vadd.f32 %v776, %v777
          %v809 = vadd.f32 %v808, %v778
          %v810 = vadd.f32 %v809, %v779
          %v811 = vadd.f32 %v810, %v780
          %v812 = vadd.f32 %v811, %v781
          %v813 = vadd.f32 %v812, %v782
          %v814 = vadd.f32 %v813, %v783
          %v815 = vadd.f32 %v814, %v784
          %v816 = vadd.f32 %v815, %v785
          %v817 = vadd.f32 %v816, %v786
          %v818 = vadd.f32 %v817, %v787
          %v819 = vadd.f32 %v818, %v788
          %v820 = vadd.f32 %v819, %v789
          %v821 = vadd.f32 %v820, %v790
          %v822 = vadd.f32 %v821, %v791
          %v823 = vadd.f32 %v822, %v792
          %v824 = vadd.f32 %v823, %v793
          %v825 = vadd.f32 %v824, %v794
          %v826 = vadd.f32 %v825, %v795
          %v827 = vadd.f32 %v826, %v796
          %v828 = vadd.f32 %v827, %v797
          %v829 = vadd.f32 %v828, %v798
          %v830 = vadd.f32 %v829, %v799
          %v831 = vadd.f32 %v830, %v800
          %v832 = vadd.f32 %v831, %v801
          %v833 = vadd.f32 %v832, %v802
          %v834 = vadd.f32 %v833, %v803
          %v835 = vadd.f32 %v834, %v804
          %v836 = vadd.f32 %v835, %v805
          %v837 = vadd.f32 %v836, %v806
          %v838 = vadd.f32 %v837, %v807
          %v839 = vrot.slane %v838, 4
          %v840 = vadd.f32 %v838, %v839
          %v841 = vrot.slane %v840, 2
          %v842 = vadd.f32 %v840, %v841
          %v843 = vrot.slane %v842, 1
          %v844 = vadd.f32 %v842, %v843
          %vm845 = vcmask 1040384
          %v846 = vsel %vm845, %v775, %v844
          %847 = vst [vmem:[%s255] sm:$0x3] %v846
        $region44: #{tpu_custom_call.1} parent=27 // pred_fallthru
          _
        %s848 = sand.u32 %s110, 1
        %s849 = scalar_lea.sflag [#allocation5], %s848
        %s850 = sand.u32 %s110, 1
        %s851 = smul.addr %s850, 256
        %s852 = scalar_lea.vmem [#allocation8], %s851
        %s853 = sand.u32 %s138, 1
        %s854 = scalar_lea.sflag [#allocation10], %s853
        %s855 = sand.u32 %s138, 1
        %s856 = smul.addr %s855, 2
        %s857 = scalar_lea.vmem [#allocation9], %s856
        // Predicated region
        $region45: #{tpu_custom_call.1} parent=27 // pred_check
          %p858 = pneg %p120
        $region46: #{tpu_custom_call.1} parent=27 // pred_check_branch
          %860 = sbr.rel (%p858) target = $region48
        $region47: #{tpu_custom_call.1} parent=27 // pred_region
          %s861 = smul.u32 32, %s30
          %863 = vsyncadd %s849, 0
          %s864 = sadd.s32 %s31, %s861
          %s865 = smul.addr %s864, 8
          %s866 = scalar_lea.hbm %s2, %s865
          %s867 = sshll.u32 %s852, 4
          %s868 = int_to_ptr.vmem [resolvable:$true] %s867
          %s869 = sshll.u32 %s866, 4
          %s870 = int_to_ptr.hbm [resolvable:$true] %s869
          %875 = dma.vmem_to_hbm [thread:$0]  %s868, 4096, %s870, %s849, 128, 128, 8
        $region48: #{tpu_custom_call.1} parent=27 // pred_fallthru
          _
        // Predicated region
        $region49: #{tpu_custom_call.1} parent=27 // pred_check
          %p876 = pneg %p148
        $region50: #{tpu_custom_call.1} parent=27 // pred_check_branch
          %878 = sbr.rel (%p876) target = $region52
        $region51: #{tpu_custom_call.1} parent=27 // pred_region
          %880 = vsyncadd %s854, 0
          %s881 = sadd.s32 %s31, %s30
          %s882 = smul.addr %s881, 2
          %s883 = scalar_lea.hbm %s3, %s882
          %s885 = sshll.u32 %s857, 4
          %s886 = int_to_ptr.vmem [resolvable:$true] %s885
          %s887 = sshll.u32 %s883, 4
          %s888 = int_to_ptr.hbm [resolvable:$true] %s887
          %890 = dma.vmem_to_hbm [thread:$0]  %s886, 32, %s888, %s854
        $region52: #{tpu_custom_call.1} parent=27 // pred_fallthru
          _
      $region28: #{tpu_custom_call.1} parent=5 // pred_fallthru
        _
      %p891 = scmp.le.s32.totalorder 2, %s20
      // Predicated region
      $region53: #{tpu_custom_call.1} parent=5 // pred_check
        %p892 = pneg %p891
      $region54: #{tpu_custom_call.1} parent=5 // pred_check_branch
        %894 = sbr.rel (%p892) target = $region56
      $region55: #{tpu_custom_call.1} parent=5 // pred_region
        %s895 = ssub.s32 %s20, 2
        // Predicated region
        $region57: #{tpu_custom_call.1} parent=55 // pred_check
          %p896 = pneg %p126
        $region58: #{tpu_custom_call.1} parent=55 // pred_check_branch
          %898 = sbr.rel (%p896) target = $region60
        $region59: #{tpu_custom_call.1} parent=55 // pred_region
          %s899 = sand.u32 %s111, 1
          %s900 = scalar_lea.sflag [#allocation5], %s899
          %s901 = sand.u32 %s111, 1
          %s902 = smul.addr %s901, 256
          %s903 = scalar_lea.vmem [#allocation8], %s902
          %905 = dma.done %s900, 4096
        $region60: #{tpu_custom_call.1} parent=55 // pred_fallthru
          _
        // Predicated region
        $region61: #{tpu_custom_call.1} parent=55 // pred_check
          %p906 = pneg %p154
        $region62: #{tpu_custom_call.1} parent=55 // pred_check_branch
          %908 = sbr.rel (%p906) target = $region64
        $region63: #{tpu_custom_call.1} parent=55 // pred_region
          %s909 = sand.u32 %s139, 1
          %s910 = scalar_lea.sflag [#allocation10], %s909
          %s911 = sand.u32 %s139, 1
          %s912 = smul.addr %s911, 2
          %s913 = scalar_lea.vmem [#allocation9], %s912
          %915 = dma.done %s910, 32
        $region64: #{tpu_custom_call.1} parent=55 // pred_fallthru
          _
      $region56: #{tpu_custom_call.1} parent=5 // pred_fallthru
        _
    $region6: #{tpu_custom_call.1} parent=1 // loop_footer
      %s24 = sadd.s32 1, %s20
    $region7: #{tpu_custom_call.1} parent=1 // loop_footer_branch
      %19 = sbr.rel target = $region3
    $region8: #{tpu_custom_call.1} parent=1 // loop_exit
      _
    %916 = vsyncpa [#allocation4], 1
    %s917 = scalar_lea.sflag [#allocation4], 1
    %918 = vsyncpa %s917, 1
    %919 = vsyncpa [#allocation7], 1
    %920 = vsyncpa [#allocation5], 1
    %s921 = scalar_lea.sflag [#allocation5], 1
    %922 = vsyncpa %s921, 1
    %923 = vsyncpa [#allocation10], 1
    %s924 = scalar_lea.sflag [#allocation10], 1
    %925 = vsyncpa %s924, 1

</llo_original>
